<compile_context>
chip_gen: v6e
topology: v6e:2x2x1
jax: 0.10.0
libtpu: 0.0.40
codegen_flags: <defaults>
</compile_context>

<pallas_src>
import functools

import jax
import jax.numpy as jnp
from jax.experimental import pallas as pl
from jax.experimental.pallas import tpu as pltpu


def _round_up(x: int, m: int) -> int:
    return ((x + m - 1) // m) * m


def _const_spec(shape):
    """BlockSpec for a block whose index never changes across grid steps.

    Single-buffered (pl.Buffered(1)): double-buffering a resident weight buys
    nothing and doubles its VMEM footprint.  Falls back cleanly if the running
    Pallas version has no `pipeline_mode` kwarg.
    """
    idx = lambda i: (0, 0)
    try:
        return pl.BlockSpec(shape, idx, pipeline_mode=pl.Buffered(1))
    except TypeError:  # older Pallas without pipeline_mode
        return pl.BlockSpec(shape, idx)


# ---------------------------------------------------------------------------
# Fused kernel:  [state | one_hot(action)] @ W1 -> tanh -> @W2 -> tanh -> @W3
# ---------------------------------------------------------------------------
def _mlp_kernel(act_ref, state_ref, w1s_ref, w1a_ref, b1_ref,
                w2_ref, b2_ref, w3_ref, b3_ref, o_ref, *, categorical):
    # state tile -> bf16 for the MXU
    x = state_ref[...].astype(jnp.bfloat16)                           # (TB, L)

    # First linear, state part.
    h = jnp.dot(x, w1s_ref[...], preferred_element_type=jnp.float32)  # (TB, Hp) f32

    # First linear, action part (fused one-hot == row-select matmul).
    if categorical:
        tb = act_ref.shape[0]
        a_rows = w1a_ref.shape[0]                                      # round_up(A, 8)
        onehot = (jax.lax.broadcasted_iota(jnp.int32, (tb, a_rows), 1)
                  == act_ref[...]).astype(jnp.bfloat16)                # (TB, Ar)
        h = h + jnp.dot(onehot, w1a_ref[...],
                        preferred_element_type=jnp.float32)
    else:
        a = act_ref[...].astype(jnp.bfloat16)                          # (TB, A)
        h = h + jnp.dot(a, w1a_ref[...],
                        preferred_element_type=jnp.float32)

    h = jnp.tanh(h + b1_ref[...])                                      # f32 tanh (EUP)

    h2 = jnp.dot(h.astype(jnp.bfloat16), w2_ref[...],
                 preferred_element_type=jnp.float32)
    h2 = jnp.tanh(h2 + b2_ref[...])                                    # f32 tanh

    y = jnp.dot(h2.astype(jnp.bfloat16), w3_ref[...],
                preferred_element_type=jnp.float32)
    o_ref[...] = (y + b3_ref[...]).astype(o_ref.dtype)   # lane-dense bf16 store


def mlp_forward(action_feat, state, w1s, w1a, b1, w2, b2, w3, b3,
                *, categorical, tile_b):
    """state: (Bp, L) f32; action_feat: (Bp, 1) i32 or (Bp, A) f32.
    Returns (Bp, Dp) bf16 with Dp = padded output width."""
    Bp, L = state.shape
    Hp = w1s.shape[1]
    Dp = w3.shape[1]
    a_cols = action_feat.shape[1]
    a_rows = w1a.shape[0]
    assert Bp % tile_b == 0

    # Explicit VMEM budget (v7x: 64 MiB physical / 32 MiB scoped default;
    # v5e scoped default is only 16 MiB -> budget instead of relying on it).
    io_tiles = 2 * tile_b * (a_cols * 4 + L * 4 + Dp * 2)          # double-buffered I/O
    weights = (L * Hp + a_rows * Hp + Hp * Hp + Hp * Dp) * 2       # bf16, single-buffered
    biases = (2 * Hp + Dp) * 4
    interm = 4 * tile_b * Hp * 4                                    # f32 intermediates / spill slack
    est = io_tiles + weights + biases + interm
    vmem_limit = int(min(64 << 20, max(2 * est + (2 << 20), 16 << 20)))

    kernel = functools.partial(_mlp_kernel, categorical=categorical)
    grid = (Bp // tile_b,)

    return pl.pallas_call(
        kernel,
        out_shape=jax.ShapeDtypeStruct((Bp, Dp), jnp.bfloat16),
        grid_spec=pltpu.PrefetchScalarGridSpec(
            num_scalar_prefetch=0,
            grid=grid,
            in_specs=[
                pl.BlockSpec((tile_b, a_cols), lambda i: (i, 0)),   # action
                pl.BlockSpec((tile_b, L), lambda i: (i, 0)),        # state
                _const_spec((L, Hp)),                               # w1 (state rows)
                _const_spec((a_rows, Hp)),                          # w1 (action rows)
                _const_spec((1, Hp)),                               # b1
                _const_spec((Hp, Hp)),                              # w2
                _const_spec((1, Hp)),                               # b2
                _const_spec((Hp, Dp)),                              # w3
                _const_spec((1, Dp)),                               # b3
            ],
            out_specs=pl.BlockSpec((tile_b, Dp), lambda i: (i, 0)),
        ),
        compiler_params=pltpu.CompilerParams(
            dimension_semantics=("parallel",),
            vmem_limit_bytes=vmem_limit),
    )(action_feat, state, w1s, w1a, b1, w2, b2, w3, b3)


# ---------------------------------------------------------------------------
# Model wrapper
# ---------------------------------------------------------------------------
class ActionConditionedLatentDynamics:
    MAX_TILE_B = 512          # large-batch tile: ~85% HBM roofline (vs ~63% @256)
    SINGLE_STEP_MAX_B = 256   # above this, split the grid so both v7x TCs get work

    def __init__(self, latent_dim, action_dim,
                 action_space_type="categorical",
                 hidden_dim=None, num_layers=2, key=None):
        assert num_layers == 2, "kernel fuses exactly 2 hidden layers"
        self.latent_dim = latent_dim
        self.action_dim = action_dim
        self.categorical = (action_space_type == "categorical")
        hidden = hidden_dim or latent_dim * 3
        self.hidden_dim = hidden

        # ----- logical f32 parameters (used by the pure-JAX reference) -----
        d_in = latent_dim + action_dim
        key = key if key is not None else jax.random.PRNGKey(0)
        ks = jax.random.split(key, 6)
        s = 0.1
        self.w1_f32 = (jax.random.normal(ks[0], (d_in, hidden)) * s).astype(jnp.float32)
        self.b1_f32 = (jax.random.normal(ks[1], (1, hidden)) * s).astype(jnp.float32)
        self.w2_f32 = (jax.random.normal(ks[2], (hidden, hidden)) * s).astype(jnp.float32)
        self.b2_f32 = (jax.random.normal(ks[3], (hidden, hidden // hidden * hidden)) * 0).astype(jnp.float32)  # placeholder, replaced below
        self.b2_f32 = (jax.random.normal(ks[3], (1, hidden)) * s).astype(jnp.float32)
        self.w3_f32 = (jax.random.normal(ks[4], (hidden, latent_dim)) * s).astype(jnp.float32)
        self.b3_f32 = (jax.random.normal(ks[5], (1, latent_dim)) * s).astype(jnp.float32)

        # ----- kernel parameters: lane-padded (128-mult), bf16 weights -----
        Hp = _round_up(hidden, 128)
        Dp = _round_up(latent_dim, 128)
        # Action rows only padded to the sublane multiple (8), not 128: the
        # fused one-hot matmul only needs action_dim real rows.
        Ap = _round_up(action_dim, 8) if self.categorical else action_dim
        self._Hp, self._Dp, self._Ap = Hp, Dp, Ap

        w1s = jnp.zeros((latent_dim, Hp), jnp.float32)
        w1s = w1s.at[:, :hidden].set(self.w1_f32[:latent_dim])
        w1a = jnp.zeros((Ap, Hp), jnp.float32)
        w1a = w1a.at[:action_dim, :hidden].set(self.w1_f32[latent_dim:])
        w2 = jnp.zeros((Hp, Hp), jnp.float32).at[:hidden, :hidden].set(self.w2_f32)
        w3 = jnp.zeros((Hp, Dp), jnp.float32).at[:hidden, :latent_dim].set(self.w3_f32)
        b1 = jnp.zeros((1, Hp), jnp.float32).at[:, :hidden].set(self.b1_f32)
        b2 = jnp.zeros((1, Hp), jnp.float32).at[:, :hidden].set(self.b2_f32)
        b3 = jnp.zeros((1, Dp), jnp.float32).at[:, :latent_dim].set(self.b3_f32)

        self.w1s = w1s.astype(jnp.bfloat16)
        self.w1a = w1a.astype(jnp.bfloat16)
        self.w2 = w2.astype(jnp.bfloat16)
        self.w3 = w3.astype(jnp.bfloat16)
        self.b1, self.b2, self.b3 = b1, b2, b3          # biases stay f32

        self._jit_forward = jax.jit(self._forward_impl)

    # ---- jitted forward: batch padding + fused kernel + output slice ----
    def _forward_impl(self, state, action):
        B = state.shape[0]
        if B <= self.SINGLE_STEP_MAX_B:
            # Latency-bound regime: one grid step, 16-row sublane packing.
            tile_b = _round_up(B, 16)
        else:
            # >= 2 "parallel" grid steps so both v7x TensorCores get work;
            # cap at 512-row tiles for the HBM-bound large-batch regime.
            tile_b = min(self.MAX_TILE_B, _round_up(-(-B // 2), 16))
        Bp = _round_up(B, tile_b)

        state = state.astype(jnp.float32)
        if self.categorical:
            act_feat = action.astype(jnp.int32).reshape(B, 1)
        else:
            act_feat = action.astype(jnp.float32).reshape(B, self.action_dim)

        if Bp > B:
            state = jnp.pad(state, ((0, Bp - B), (0, 0)))
            act_feat = jnp.pad(act_feat, ((0, Bp - B), (0, 0)))

        out = mlp_forward(act_feat, state,
                          self.w1s, self.w1a, self.b1,
                          self.w2, self.b2, self.w3, self.b3,
                          categorical=self.categorical, tile_b=tile_b)
        # bf16 kernel output (halves HBM writeback) -> slice + cast back to f32.
        return out[:B, :self.latent_dim].astype(jnp.float32)

    def __call__(self, state, action):
        return self._jit_forward(state, action)

    # pure-JAX f32 reference for correctness checking
    def reference(self, state, action):
        if self.categorical:
            a = jax.nn.one_hot(action, self.action_dim, dtype=jnp.float32)
        else:
            a = action.astype(jnp.float32)
        x = jnp.concatenate([state.astype(jnp.float32), a], axis=-1)
        h = jnp.tanh(x @ self.w1_f32 + self.b1_f32)
        h = jnp.tanh(h @ self.w2_f32 + self.b2_f32)
        return h @ self.w3_f32 + self.b3_f32


if __name__ == "__main__":
    key = jax.random.PRNGKey(0)
    k_state, k_action, k_params = jax.random.split(key, 3)

    batch = 16
    latent_dim = 16
    action_dim = 4

    state = jax.random.normal(k_state, (batch, latent_dim), dtype=jnp.float32)
    action = jax.random.randint(k_action, (batch,), 0, action_dim, dtype=jnp.int32)

    model = ActionConditionedLatentDynamics(latent_dim, action_dim, key=k_params)

    out = jax.block_until_ready(model(state, action))
    ref = model.reference(state, action)

    assert out.shape == (batch, latent_dim), out.shape
    assert out.dtype == jnp.float32, out.dtype
    # bf16 MXU inputs + bf16 output store -> loosened tolerance vs f32 reference
    max_err = float(jnp.max(jnp.abs(out - ref)))
    assert jnp.allclose(out, ref, atol=1e-2, rtol=1e-2), (
        f"mismatch vs reference: max abs diff = {max_err}")

    print("KERNEL_OK")
</pallas_src>

<mosaic_0001>
module attributes {stable_mosaic.version = 11 : i64} {
  func.func @_mlp_kernel(%arg0: i32, %arg1: memref<16x1xi32, #tpu.memory_space<vmem>>, %arg2: memref<16x16xf32, #tpu.memory_space<vmem>>, %arg3: memref<16x128xbf16, #tpu.memory_space<vmem>>, %arg4: memref<8x128xbf16, #tpu.memory_space<vmem>>, %arg5: memref<1x128xf32, #tpu.memory_space<vmem>>, %arg6: memref<128x128xbf16, #tpu.memory_space<vmem>>, %arg7: memref<1x128xf32, #tpu.memory_space<vmem>>, %arg8: memref<128x128xbf16, #tpu.memory_space<vmem>>, %arg9: memref<1x128xf32, #tpu.memory_space<vmem>>, %arg10: memref<16x128xbf16, #tpu.memory_space<vmem>>) attributes {dimension_semantics = [#tpu.dimension_semantics<parallel>], iteration_bounds = array<i64: 1>, scalar_prefetch = 0 : i64, scratch_operands = 0 : i64, tpu.core_type = #tpu.core_type<tc>, window_params = [{transform_indices = @transform_0, window_bounds = array<i64: 16, 1>}, {transform_indices = @transform_1, window_bounds = array<i64: 16, 16>}, {pipeline_mode = #tpu.pipeline_mode<synchronous>, transform_indices = @transform_2, window_bounds = array<i64: 16, 128>}, {pipeline_mode = #tpu.pipeline_mode<synchronous>, transform_indices = @transform_3, window_bounds = array<i64: 8, 128>}, {pipeline_mode = #tpu.pipeline_mode<synchronous>, transform_indices = @transform_4, window_bounds = array<i64: 1, 128>}, {pipeline_mode = #tpu.pipeline_mode<synchronous>, transform_indices = @transform_5, window_bounds = array<i64: 128, 128>}, {pipeline_mode = #tpu.pipeline_mode<synchronous>, transform_indices = @transform_6, window_bounds = array<i64: 1, 128>}, {pipeline_mode = #tpu.pipeline_mode<synchronous>, transform_indices = @transform_7, window_bounds = array<i64: 128, 128>}, {pipeline_mode = #tpu.pipeline_mode<synchronous>, transform_indices = @transform_8, window_bounds = array<i64: 1, 128>}, {transform_indices = @transform_9, window_bounds = array<i64: 16, 128>}]} {
    %c0 = arith.constant 0 : index
    %c0_0 = arith.constant 0 : index
    %0 = vector.load %arg2[%c0, %c0_0] : memref<16x16xf32, #tpu.memory_space<vmem>>, vector<16x16xf32>
    %1 = arith.truncf %0 : vector<16x16xf32> to vector<16x16xbf16>
    %c0_1 = arith.constant 0 : index
    %c0_2 = arith.constant 0 : index
    %2 = vector.load %arg3[%c0_1, %c0_2] : memref<16x128xbf16, #tpu.memory_space<vmem>>, vector<16x128xbf16>
    %cst = arith.constant dense<0.000000e+00> : vector<16x128xf32>
    %3 = tpu.matmul %1, %2, %cst {dimension_numbers = #tpu.dot_dimension_numbers<[1], [0], [0], [1], [0, 0, 1, 1], [], []>} : vector<16x16xbf16>, vector<16x128xbf16>, vector<16x128xf32> -> vector<16x128xf32>
    %4 = tpu.iota {dimensions = array<i32: 1>} : vector<16x8xi32>
    %c0_3 = arith.constant 0 : index
    %c0_4 = arith.constant 0 : index
    %5 = vector.load %arg1[%c0_3, %c0_4] : memref<16x1xi32, #tpu.memory_space<vmem>>, vector<16x1xi32>
    %6 = vector.broadcast %5 : vector<16x1xi32> to vector<16x8xi32>
    %7 = arith.cmpi eq, %4, %6 : vector<16x8xi32>
    %8 = arith.extui %7 : vector<16x8xi1> to vector<16x8xi32>
    %9 = arith.sitofp %8 : vector<16x8xi32> to vector<16x8xf32>
    %10 = arith.truncf %9 : vector<16x8xf32> to vector<16x8xbf16>
    %c0_5 = arith.constant 0 : index
    %c0_6 = arith.constant 0 : index
    %11 = vector.load %arg4[%c0_5, %c0_6] : memref<8x128xbf16, #tpu.memory_space<vmem>>, vector<8x128xbf16>
    %cst_7 = arith.constant dense<0.000000e+00> : vector<16x128xf32>
    %12 = tpu.matmul %10, %11, %cst_7 {dimension_numbers = #tpu.dot_dimension_numbers<[1], [0], [0], [1], [0, 0, 1, 1], [], []>} : vector<16x8xbf16>, vector<8x128xbf16>, vector<16x128xf32> -> vector<16x128xf32>
    %13 = arith.addf %3, %12 : vector<16x128xf32>
    %c0_8 = arith.constant 0 : index
    %c0_9 = arith.constant 0 : index
    %14 = vector.load %arg5[%c0_8, %c0_9] : memref<1x128xf32, #tpu.memory_space<vmem>>, vector<1x128xf32>
    %15 = vector.broadcast %14 : vector<1x128xf32> to vector<16x128xf32>
    %16 = arith.addf %13, %15 : vector<16x128xf32>
    %17 = math.tanh %16 : vector<16x128xf32>
    %18 = arith.truncf %17 : vector<16x128xf32> to vector<16x128xbf16>
    %c0_10 = arith.constant 0 : index
    %c0_11 = arith.constant 0 : index
    %19 = vector.load %arg6[%c0_10, %c0_11] : memref<128x128xbf16, #tpu.memory_space<vmem>>, vector<128x128xbf16>
    %cst_12 = arith.constant dense<0.000000e+00> : vector<16x128xf32>
    %20 = tpu.matmul %18, %19, %cst_12 {dimension_numbers = #tpu.dot_dimension_numbers<[1], [0], [0], [1], [0, 0, 1, 1], [], []>} : vector<16x128xbf16>, vector<128x128xbf16>, vector<16x128xf32> -> vector<16x128xf32>
    %c0_13 = arith.constant 0 : index
    %c0_14 = arith.constant 0 : index
    %21 = vector.load %arg7[%c0_13, %c0_14] : memref<1x128xf32, #tpu.memory_space<vmem>>, vector<1x128xf32>
    %22 = vector.broadcast %21 : vector<1x128xf32> to vector<16x128xf32>
    %23 = arith.addf %20, %22 : vector<16x128xf32>
    %24 = math.tanh %23 : vector<16x128xf32>
    %25 = arith.truncf %24 : vector<16x128xf32> to vector<16x128xbf16>
    %c0_15 = arith.constant 0 : index
    %c0_16 = arith.constant 0 : index
    %26 = vector.load %arg8[%c0_15, %c0_16] : memref<128x128xbf16, #tpu.memory_space<vmem>>, vector<128x128xbf16>
    %cst_17 = arith.constant dense<0.000000e+00> : vector<16x128xf32>
    %27 = tpu.matmul %25, %26, %cst_17 {dimension_numbers = #tpu.dot_dimension_numbers<[1], [0], [0], [1], [0, 0, 1, 1], [], []>} : vector<16x128xbf16>, vector<128x128xbf16>, vector<16x128xf32> -> vector<16x128xf32>
    %c0_18 = arith.constant 0 : index
    %c0_19 = arith.constant 0 : index
    %28 = vector.load %arg9[%c0_18, %c0_19] : memref<1x128xf32, #tpu.memory_space<vmem>>, vector<1x128xf32>
    %29 = vector.broadcast %28 : vector<1x128xf32> to vector<16x128xf32>
    %30 = arith.addf %27, %29 : vector<16x128xf32>
    %31 = arith.truncf %30 : vector<16x128xf32> to vector<16x128xbf16>
    %c0_20 = arith.constant 0 : index
    %c0_21 = arith.constant 0 : index
    %32 = vector.load %arg10[%c0_20, %c0_21] : memref<16x128xbf16, #tpu.memory_space<vmem>>, vector<16x128xbf16>
    tpu.vector_store %arg10[%c0_20, %c0_21], %31 {strides = array<i32>} : memref<16x128xbf16, #tpu.memory_space<vmem>>, vector<16x128xbf16>,
    return
  }
  func.func @transform_0(%arg0: i32) -> (i32, i32) {
    %c0_i32 = arith.constant 0 : i32
    %c0_i32_0 = arith.constant 0 : i32
    return %arg0, %c0_i32 : i32, i32
  }
  func.func @transform_1(%arg0: i32) -> (i32, i32) {
    %c0_i32 = arith.constant 0 : i32
    %c0_i32_0 = arith.constant 0 : i32
    return %arg0, %c0_i32 : i32, i32
  }
  func.func @transform_2(%arg0: i32) -> (i32, i32) {
    %c0_i32 = arith.constant 0 : i32
    %c0_i32_0 = arith.constant 0 : i32
    %c0_i32_1 = arith.constant 0 : i32
    return %c0_i32, %c0_i32_0 : i32, i32
  }
  func.func @transform_3(%arg0: i32) -> (i32, i32) {
    %c0_i32 = arith.constant 0 : i32
    %c0_i32_0 = arith.constant 0 : i32
    %c0_i32_1 = arith.constant 0 : i32
    return %c0_i32, %c0_i32_0 : i32, i32
  }
  func.func @transform_4(%arg0: i32) -> (i32, i32) {
    %c0_i32 = arith.constant 0 : i32
    %c0_i32_0 = arith.constant 0 : i32
    %c0_i32_1 = arith.constant 0 : i32
    return %c0_i32, %c0_i32_0 : i32, i32
  }
  func.func @transform_5(%arg0: i32) -> (i32, i32) {
    %c0_i32 = arith.constant 0 : i32
    %c0_i32_0 = arith.constant 0 : i32
    %c0_i32_1 = arith.constant 0 : i32
    return %c0_i32, %c0_i32_0 : i32, i32
  }
  func.func @transform_6(%arg0: i32) -> (i32, i32) {
    %c0_i32 = arith.constant 0 : i32
    %c0_i32_0 = arith.constant 0 : i32
    %c0_i32_1 = arith.constant 0 : i32
    return %c0_i32, %c0_i32_0 : i32, i32
  }
  func.func @transform_7(%arg0: i32) -> (i32, i32) {
    %c0_i32 = arith.constant 0 : i32
    %c0_i32_0 = arith.constant 0 : i32
    %c0_i32_1 = arith.constant 0 : i32
    return %c0_i32, %c0_i32_0 : i32, i32
  }
  func.func @transform_8(%arg0: i32) -> (i32, i32) {
    %c0_i32 = arith.constant 0 : i32
    %c0_i32_0 = arith.constant 0 : i32
    %c0_i32_1 = arith.constant 0 : i32
    return %c0_i32, %c0_i32_0 : i32, i32
  }
  func.func @transform_9(%arg0: i32) -> (i32, i32) {
    %c0_i32 = arith.constant 0 : i32
    %c0_i32_0 = arith.constant 0 : i32
    return %arg0, %c0_i32 : i32, i32
  }
}

</mosaic_0001>

<llo_original>
// kernel: _forward_impl.1
$region0: #{_forward_impl.1}
  #allocation0 [shape = 'u32[]', space=smem, size = 0x4, offset = 0x4, fixed_abs, tag = 'smem constant byte address 0x4 - core index']
  #allocation1 [shape = 'u32[144,128]{1,0:T(1,128)}', space=vmem, size = 0x12000, scoped, tag = 'internal scratch']
  %s0 = inlined_call_operand.vmem [shape: s32[16,1], index: 0, kind: input, shape index: {}]
  %s1 = inlined_call_operand.vmem [shape: f32[16,16], index: 1, kind: input, shape index: {}]
  %s2 = inlined_call_operand.hbm [shape: bf16[16,128], index: 2, kind: input, shape index: {}]
  %s3 = inlined_call_operand.vmem [shape: bf16[8,128], index: 3, kind: input, shape index: {}]
  %s4 = inlined_call_operand.vmem [shape: f32[1,128], index: 4, kind: input, shape index: {}]
  %s5 = inlined_call_operand.hbm [shape: bf16[128,128], index: 5, kind: input, shape index: {}]
  %s6 = inlined_call_operand.vmem [shape: f32[1,128], index: 6, kind: input, shape index: {}]
  %s7 = inlined_call_operand.hbm [shape: bf16[128,128], index: 7, kind: input, shape index: {}]
  %s8 = inlined_call_operand.vmem [shape: f32[1,128], index: 8, kind: input, shape index: {}]
  %s9 = inlined_call_operand.vmem [shape: bf16[16,128], index: 9, kind: output, shape index: {}]
  %s10 = sld [smem:[#allocation0]]
  $region58: #{_forward_impl.1} parent=0
    _
  %s12 = ssub.s32 1, %s10
  %s13 = scalar_select 0, %s12, %s10
  $region1: #{_forward_impl.1} parent=0
    #allocation2 [shape = 'u8[4096]{0}', space=vmem, size = 0x1000, scoped, tag = 'input window, operand 2, single buffered']
    #allocation3 [shape = 's32[1]{0}', space=sflag, size = 0x4, scoped, tag = 'scoped memory for _forward_impl.1']
    #allocation4 [shape = 'u8[32768]{0}', space=vmem, size = 0x8000, scoped, tag = 'input window, operand 5, single buffered']
    #allocation5 [shape = 's32[1]{0}', space=sflag, size = 0x4, scoped, tag = 'scoped memory for _forward_impl.1']
    #allocation6 [shape = 'u8[32768]{0}', space=vmem, size = 0x8000, scoped, tag = 'input window, operand 7, single buffered']
    %14 = vsyncpa [#allocation3], 0
    %15 = vsyncpa [#allocation5], 0
    // Predicated region
    $region2: #{_forward_impl.1} parent=1 // pred_check
      _
    $region3: #{_forward_impl.1} parent=1 // pred_check_branch
      %17 = sbr.rel (0) target = $region5
    $region4: #{_forward_impl.1} parent=1 // pred_region
      _
    $region5: #{_forward_impl.1} parent=1 // pred_fallthru
      _
    // Predicated region
    $region6: #{_forward_impl.1} parent=1 // pred_check
      _
    $region7: #{_forward_impl.1} parent=1 // pred_check_branch
      %19 = sbr.rel (0) target = $region9
    $region8: #{_forward_impl.1} parent=1 // pred_region
      _
    $region9: #{_forward_impl.1} parent=1 // pred_fallthru
      _
    // Predicated region
    $region10: #{_forward_impl.1} parent=1 // pred_check
      _
    $region11: #{_forward_impl.1} parent=1 // pred_check_branch
      %21 = sbr.rel (0) target = $region13
    $region12: #{_forward_impl.1} parent=1 // pred_region
      %s23 = ssub.s32 128, 128
      %24 = vsyncadd [#allocation3], %s23
      %s25 = sshll.u32 [#allocation2], 4
      %s26 = int_to_ptr.vmem [resolvable:$true] %s25
      %31 = dma.hbm_to_vmem [thread:$0]  %s2, 128, %s26, [#allocation3], 64, 64, 4
    $region13: #{_forward_impl.1} parent=1 // pred_fallthru
      _
    // Predicated region
    $region14: #{_forward_impl.1} parent=1 // pred_check
      _
    $region15: #{_forward_impl.1} parent=1 // pred_check_branch
      %33 = sbr.rel (0) target = $region17
    $region16: #{_forward_impl.1} parent=1 // pred_region
      _
    $region17: #{_forward_impl.1} parent=1 // pred_fallthru
      _
    // Predicated region
    $region18: #{_forward_impl.1} parent=1 // pred_check
      _
    $region19: #{_forward_impl.1} parent=1 // pred_check_branch
      %35 = sbr.rel (0) target = $region21
    $region20: #{_forward_impl.1} parent=1 // pred_region
      _
    $region21: #{_forward_impl.1} parent=1 // pred_fallthru
      _
    // Predicated region
    $region22: #{_forward_impl.1} parent=1 // pred_check
      _
    $region23: #{_forward_impl.1} parent=1 // pred_check_branch
      %37 = sbr.rel (0) target = $region25
    $region24: #{_forward_impl.1} parent=1 // pred_region
      %s39 = ssub.s32 1024, 1024
      %40 = vsyncadd [#allocation5], %s39
      %s41 = sshll.u32 [#allocation4], 4
      %s42 = int_to_ptr.vmem [resolvable:$true] %s41
      %47 = dma.hbm_to_vmem [thread:$0]  %s5, 1024, %s42, [#allocation5], 64, 64, 4
    $region25: #{_forward_impl.1} parent=1 // pred_fallthru
      _
    // Predicated region
    $region26: #{_forward_impl.1} parent=1 // pred_check
      _
    $region27: #{_forward_impl.1} parent=1 // pred_check_branch
      %49 = sbr.rel (0) target = $region29
    $region28: #{_forward_impl.1} parent=1 // pred_region
      _
    $region29: #{_forward_impl.1} parent=1 // pred_fallthru
      _
    // Predicated region
    $region30: #{_forward_impl.1} parent=1 // pred_check
      _
    $region31: #{_forward_impl.1} parent=1 // pred_check_branch
      %51 = sbr.rel (0) target = $region33
    $region32: #{_forward_impl.1} parent=1 // pred_region
      %s53 = ssub.s32 1024, 1024
      %54 = vsyncadd [#allocation5], %s53
      %s55 = sshll.u32 [#allocation6], 4
      %s56 = int_to_ptr.vmem [resolvable:$true] %s55
      %61 = dma.hbm_to_vmem [thread:$0]  %s7, 1024, %s56, [#allocation5], 64, 64, 4
    $region33: #{_forward_impl.1} parent=1 // pred_fallthru
      _
    // Predicated region
    $region34: #{_forward_impl.1} parent=1 // pred_check
      _
    $region35: #{_forward_impl.1} parent=1 // pred_check_branch
      %63 = sbr.rel (0) target = $region37
    $region36: #{_forward_impl.1} parent=1 // pred_region
      _
    $region37: #{_forward_impl.1} parent=1 // pred_fallthru
      _
    // Predicated region
    $region38: #{_forward_impl.1} parent=1 // pred_check
      _
    $region39: #{_forward_impl.1} parent=1 // pred_check_branch
      %65 = sbr.rel (0) target = $region41
    $region40: #{_forward_impl.1} parent=1 // pred_region
      %66 = dma.done [#allocation3], 128
    $region41: #{_forward_impl.1} parent=1 // pred_fallthru
      _
    // Predicated region
    $region42: #{_forward_impl.1} parent=1 // pred_check
      _
    $region43: #{_forward_impl.1} parent=1 // pred_check_branch
      %68 = sbr.rel (0) target = $region45
    $region44: #{_forward_impl.1} parent=1 // pred_region
      %69 = dma.done [#allocation5], 1024
    $region45: #{_forward_impl.1} parent=1 // pred_fallthru
      _
    // Predicated region
    $region46: #{_forward_impl.1} parent=1 // pred_check
      _
    $region47: #{_forward_impl.1} parent=1 // pred_check_branch
      %71 = sbr.rel (0) target = $region49
    $region48: #{_forward_impl.1} parent=1 // pred_region
      %72 = dma.done [#allocation5], 1024
    $region49: #{_forward_impl.1} parent=1 // pred_fallthru
      _
    %v74 = vld [vmem:[%s1] sm:$0xff]
    %v75 = vld [vmem:[%s1 + $0x8] sm:$0xff]
    %v76 = vpack.c.bf16 %v75, %v74
    %v77 = vld [vmem:[#allocation2] sm:$0xf]
    %v78 = vld [vmem:[#allocation2 + $0x4] sm:$0xf]
    %v79 = vlaneseq
    %v80 = vand.u32 %v79, 127
    %v81 = vld [vmem:[%s0] sm:$0xff]
    %v82 = vld [vmem:[%s0 + $0x8] sm:$0xff]
    %83 = vset.pattern.permute.xlu0 0
    %84 = vperm.xlu0 %83, %v81
    %v85 = vpop.permute.xlu0 %84
    %86 = vset.pattern.permute.xlu0 0
    %87 = vperm.xlu0 %86, %v82
    %v88 = vpop.permute.xlu0 %87
    %vm89 = vcmp.eq.s32.totalorder %v80, %v85
    %vm90 = vcmp.eq.s32.totalorder %v80, %v88
    %v91 = vsel %vm89, 1, 0
    %v92 = vsel %vm90, 1, 0
    %v93 = vcvt.s32.f32 %v91
    %v94 = vcvt.s32.f32 %v92
    %v95 = vpack.c.bf16 %v94, %v93
    %v96 = vld [vmem:[%s3] sm:$0xf]
    %vm97 = vcmask 64512
    %v99 = vsel %vm97, %v95, 0
    %vm101 = vcmask 1043456
    %v103 = vsel %vm101, %v96, 0
    %105 = vmatprep.subr.bf16.mxu0 0
    %106 = vmatpush1.bf16.msra.mxu0 0
    %107 = vmatprep.subr.bf16.mxu0 0
    %108 = vmatpush1.bf16.msra.mxu0 0
    %109 = vmatprep.subr.bf16.mxu0 0
    %110 = vmatpush1.bf16.msra.mxu0 0
    %111 = vmatprep.subr.bf16.mxu0 0
    %112 = vmatpush1.bf16.msra.mxu0 0
    %113 = vmatprep.subr.bf16.mxu0 0
    %114 = vmatpush1.bf16.msra.mxu0 0
    %115 = vmatprep.subr.bf16.mxu0 0
    %116 = vmatpush1.bf16.msra.mxu0 0
    %117 = vmatprep.subr.bf16.mxu0 0
    %118 = vmatpush1.bf16.msra.mxu0 0
    %119 = vmatprep.subr.bf16.mxu0 0
    %120 = vmatpush1.bf16.msra.mxu0 %v103
    %121 = vmatprep.subr.bf16.mxu0 0
    %122 = vmatpush2.bf16.msra.mxu0 0
    %123 = vmatprep.subr.bf16.mxu0 0
    %124 = vmatpush2.bf16.msra.mxu0 0
    %125 = vmatprep.subr.bf16.mxu0 0
    %126 = vmatpush2.bf16.msra.mxu0 0
    %127 = vmatprep.subr.bf16.mxu0 0
    %128 = vmatpush2.bf16.msra.mxu0 0
    %129 = vmatprep.subr.bf16.mxu0 0
    %130 = vmatpush2.bf16.msra.mxu0 0
    %131 = vmatprep.subr.bf16.mxu0 0
    %132 = vmatpush2.bf16.msra.mxu0 0
    %133 = vmatprep.subr.bf16.mxu0 0
    %134 = vmatpush2.bf16.msra.mxu0 0
    %135 = vmatprep.subr.bf16.mxu0 0
    %136 = vmatpush2.bf16.msra.mxu0 0
    %137 = vmatprep.mubr.bf16.mxu0 0
    %138 = vmatmul.mubr.bf16.gmra.mxu0 %v99
    %v139 = vpop.f32.mrf.mxu0
    %v140 = vadd.f32 0.0, %v139
    %v141 = vpop.f32.mrf.mxu0
    %v142 = vpop.f32.mrf.mxu0
    %v143 = vadd.f32 0.0, %v142
    %v144 = vpop.f32.mrf.mxu0
    %145 = vdwg.mxu0
    %v148 = vunpack.c.l.b16 %v77
    %v149 = vunpack.c.l.b16 %v78
    %v150 = vpack.c.b16 %v149, %v148
    %vm152 = vcmask 130048
    %v154 = vsel %vm152, %v76, 0
    %156 = vmatprep.subr.bf16.mxu0 0
    %157 = vmatpush1.bf16.msra.mxu0 0
    %158 = vmatprep.subr.bf16.mxu0 0
    %159 = vmatpush1.bf16.msra.mxu0 0
    %160 = vmatprep.subr.bf16.mxu0 0
    %161 = vmatpush1.bf16.msra.mxu0 0
    %162 = vmatprep.subr.bf16.mxu0 0
    %163 = vmatpush1.bf16.msra.mxu0 0
    %164 = vmatprep.subr.bf16.mxu0 0
    %165 = vmatpush1.bf16.msra.mxu0 0
    %166 = vmatprep.subr.bf16.mxu0 0
    %167 = vmatpush1.bf16.msra.mxu0 0
    %168 = vmatprep.subr.bf16.mxu0 0
    %169 = vmatpush1.bf16.msra.mxu0 0
    %170 = vmatprep.subr.bf16.mxu0 0
    %171 = vmatpush1.bf16.msra.mxu0 %v150
    %172 = vmatprep.subr.bf16.mxu0 0
    %173 = vmatpush2.bf16.msra.mxu0 0
    %174 = vmatprep.subr.bf16.mxu0 0
    %175 = vmatpush2.bf16.msra.mxu0 0
    %176 = vmatprep.subr.bf16.mxu0 0
    %177 = vmatpush2.bf16.msra.mxu0 0
    %178 = vmatprep.subr.bf16.mxu0 0
    %179 = vmatpush2.bf16.msra.mxu0 0
    %180 = vmatprep.subr.bf16.mxu0 0
    %181 = vmatpush2.bf16.msra.mxu0 0
    %182 = vmatprep.subr.bf16.mxu0 0
    %183 = vmatpush2.bf16.msra.mxu0 0
    %184 = vmatprep.subr.bf16.mxu0 0
    %185 = vmatpush2.bf16.msra.mxu0 0
    %186 = vmatprep.subr.bf16.mxu0 0
    %187 = vmatpush2.bf16.msra.mxu0 0
    %188 = vmatprep.mubr.bf16.mxu0 0
    %189 = vmatmul.mubr.bf16.gmra.mxu0 %v154
    %v190 = vpop.f32.mrf.mxu0
    %v191 = vadd.f32 %v140, %v190
    %v192 = vpop.f32.mrf.mxu0
    %v193 = vpop.f32.mrf.mxu0
    %v194 = vadd.f32 %v143, %v193
    %v195 = vpop.f32.mrf.mxu0
    %196 = vdwg.mxu0
    %v197 = vld [vmem:[%s4] sm:$0x1]
    %v199 = vlaneseq
    %v200 = vshrl.u32 %v199, 7
    %v201 = vsub.s32 0, %v200
    %v202 = vrot.slane %v197, %v201
    %v204 = vadd.f32 %v191, %v202
    %v205 = vadd.f32 %v194, %v202
    %v206 = vtanh.pop %v204
    %v207 = vtanh.pop %v205
    %v208 = vpack.c.bf16 %v207, %v206
    %v209 = vld [vmem:[#allocation4] sm:$0xf]
    %v210 = vld [vmem:[#allocation4 + $0x4] sm:$0xf]
    %v211 = vld [vmem:[#allocation4 + $0x8] sm:$0xf]
    %v212 = vld [vmem:[#allocation4 + $0xc] sm:$0xf]
    %v213 = vld [vmem:[#allocation4 + $0x10] sm:$0xf]
    %v214 = vld [vmem:[#allocation4 + $0x14] sm:$0xf]
    %v215 = vld [vmem:[#allocation4 + $0x18] sm:$0xf]
    %v216 = vld [vmem:[#allocation4 + $0x1c] sm:$0xf]
    %v217 = vld [vmem:[#allocation4 + $0x20] sm:$0xf]
    %v218 = vld [vmem:[#allocation4 + $0x24] sm:$0xf]
    %v219 = vld [vmem:[#allocation4 + $0x28] sm:$0xf]
    %v220 = vld [vmem:[#allocation4 + $0x2c] sm:$0xf]
    %v221 = vld [vmem:[#allocation4 + $0x30] sm:$0xf]
    %v222 = vld [vmem:[#allocation4 + $0x34] sm:$0xf]
    %v223 = vld [vmem:[#allocation4 + $0x38] sm:$0xf]
    %v224 = vld [vmem:[#allocation4 + $0x3c] sm:$0xf]
    %v225 = vld [vmem:[%s6] sm:$0x1]
    %v227 = vlaneseq
    %v228 = vshrl.u32 %v227, 7
    %v229 = vsub.s32 0, %v228
    %v230 = vrot.slane %v225, %v229
    %v248 = vunpack.c.l.b16 %v209
    %v249 = vunpack.c.l.b16 %v210
    %v250 = vunpack.c.l.b16 %v211
    %v251 = vunpack.c.l.b16 %v212
    %v252 = vunpack.c.l.b16 %v213
    %v253 = vunpack.c.l.b16 %v214
    %v254 = vunpack.c.l.b16 %v215
    %v255 = vunpack.c.l.b16 %v216
    %v256 = vunpack.c.l.b16 %v217
    %v257 = vunpack.c.l.b16 %v218
    %v258 = vunpack.c.l.b16 %v219
    %v259 = vunpack.c.l.b16 %v220
    %v260 = vunpack.c.l.b16 %v221
    %v261 = vunpack.c.l.b16 %v222
    %v262 = vunpack.c.l.b16 %v223
    %v263 = vunpack.c.l.b16 %v224
    %v264 = vpack.c.b16 %v249, %v248
    %v265 = vpack.c.b16 %v251, %v250
    %v266 = vpack.c.b16 %v253, %v252
    %v267 = vpack.c.b16 %v255, %v254
    %v268 = vpack.c.b16 %v257, %v256
    %v269 = vpack.c.b16 %v259, %v258
    %v270 = vpack.c.b16 %v261, %v260
    %v271 = vpack.c.b16 %v263, %v262
    %280 = vmatprep.subr.bf16.mxu0 0
    %281 = vmatpush1.bf16.msra.mxu0 %v271
    %282 = vmatprep.subr.bf16.mxu0 0
    %283 = vmatpush1.bf16.msra.mxu0 %v270
    %284 = vmatprep.subr.bf16.mxu0 0
    %285 = vmatpush1.bf16.msra.mxu0 %v269
    %286 = vmatprep.subr.bf16.mxu0 0
    %287 = vmatpush1.bf16.msra.mxu0 %v268
    %288 = vmatprep.subr.bf16.mxu0 0
    %289 = vmatpush1.bf16.msra.mxu0 %v267
    %290 = vmatprep.subr.bf16.mxu0 0
    %291 = vmatpush1.bf16.msra.mxu0 %v266
    %292 = vmatprep.subr.bf16.mxu0 0
    %293 = vmatpush1.bf16.msra.mxu0 %v265
    %294 = vmatprep.subr.bf16.mxu0 0
    %295 = vmatpush1.bf16.msra.mxu0 %v264
    %296 = vmatprep.subr.bf16.mxu0 0
    %297 = vmatpush2.bf16.msra.mxu0 0
    %298 = vmatprep.subr.bf16.mxu0 0
    %299 = vmatpush2.bf16.msra.mxu0 0
    %300 = vmatprep.subr.bf16.mxu0 0
    %301 = vmatpush2.bf16.msra.mxu0 0
    %302 = vmatprep.subr.bf16.mxu0 0
    %303 = vmatpush2.bf16.msra.mxu0 0
    %304 = vmatprep.subr.bf16.mxu0 0
    %305 = vmatpush2.bf16.msra.mxu0 0
    %306 = vmatprep.subr.bf16.mxu0 0
    %307 = vmatpush2.bf16.msra.mxu0 0
    %308 = vmatprep.subr.bf16.mxu0 0
    %309 = vmatpush2.bf16.msra.mxu0 0
    %310 = vmatprep.subr.bf16.mxu0 0
    %311 = vmatpush2.bf16.msra.mxu0 0
    %312 = vmatprep.mubr.bf16.mxu0 0
    %313 = vmatmul.mubr.bf16.gmra.mxu0 %v208
    %v314 = vpop.f32.mrf.mxu0
    %v315 = vadd.f32 %v230, %v314
    %v316 = vpop.f32.mrf.mxu0
    %v317 = vpop.f32.mrf.mxu0
    %v318 = vadd.f32 %v230, %v317
    %v319 = vpop.f32.mrf.mxu0
    %320 = vdwg.mxu0
    %v321 = vtanh.pop %v315
    %v322 = vtanh.pop %v318
    %v323 = vpack.c.bf16 %v322, %v321
    %v324 = vld [vmem:[#allocation6] sm:$0xf]
    %v325 = vld [vmem:[#allocation6 + $0x4] sm:$0xf]
    %v326 = vld [vmem:[#allocation6 + $0x8] sm:$0xf]
    %v327 = vld [vmem:[#allocation6 + $0xc] sm:$0xf]
    %v328 = vld [vmem:[#allocation6 + $0x10] sm:$0xf]
    %v329 = vld [vmem:[#allocation6 + $0x14] sm:$0xf]
    %v330 = vld [vmem:[#allocation6 + $0x18] sm:$0xf]
    %v331 = vld [vmem:[#allocation6 + $0x1c] sm:$0xf]
    %v332 = vld [vmem:[#allocation6 + $0x20] sm:$0xf]
    %v333 = vld [vmem:[#allocation6 + $0x24] sm:$0xf]
    %v334 = vld [vmem:[#allocation6 + $0x28] sm:$0xf]
    %v335 = vld [vmem:[#allocation6 + $0x2c] sm:$0xf]
    %v336 = vld [vmem:[#allocation6 + $0x30] sm:$0xf]
    %v337 = vld [vmem:[#allocation6 + $0x34] sm:$0xf]
    %v338 = vld [vmem:[#allocation6 + $0x38] sm:$0xf]
    %v339 = vld [vmem:[#allocation6 + $0x3c] sm:$0xf]
    %v340 = vld [vmem:[%s8] sm:$0x1]
    %v342 = vlaneseq
    %v343 = vshrl.u32 %v342, 7
    %v344 = vsub.s32 0, %v343
    %v345 = vrot.slane %v340, %v344
    %v363 = vunpack.c.l.b16 %v324
    %v364 = vunpack.c.l.b16 %v325
    %v365 = vunpack.c.l.b16 %v326
    %v366 = vunpack.c.l.b16 %v327
    %v367 = vunpack.c.l.b16 %v328
    %v368 = vunpack.c.l.b16 %v329
    %v369 = vunpack.c.l.b16 %v330
    %v370 = vunpack.c.l.b16 %v331
    %v371 = vunpack.c.l.b16 %v332
    %v372 = vunpack.c.l.b16 %v333
    %v373 = vunpack.c.l.b16 %v334
    %v374 = vunpack.c.l.b16 %v335
    %v375 = vunpack.c.l.b16 %v336
    %v376 = vunpack.c.l.b16 %v337
    %v377 = vunpack.c.l.b16 %v338
    %v378 = vunpack.c.l.b16 %v339
    %v379 = vpack.c.b16 %v364, %v363
    %v380 = vpack.c.b16 %v366, %v365
    %v381 = vpack.c.b16 %v368, %v367
    %v382 = vpack.c.b16 %v370, %v369
    %v383 = vpack.c.b16 %v372, %v371
    %v384 = vpack.c.b16 %v374, %v373
    %v385 = vpack.c.b16 %v376, %v375
    %v386 = vpack.c.b16 %v378, %v377
    %395 = vmatprep.subr.bf16.mxu0 0
    %396 = vmatpush1.bf16.msra.mxu0 %v386
    %397 = vmatprep.subr.bf16.mxu0 0
    %398 = vmatpush1.bf16.msra.mxu0 %v385
    %399 = vmatprep.subr.bf16.mxu0 0
    %400 = vmatpush1.bf16.msra.mxu0 %v384
    %401 = vmatprep.subr.bf16.mxu0 0
    %402 = vmatpush1.bf16.msra.mxu0 %v383
    %403 = vmatprep.subr.bf16.mxu0 0
    %404 = vmatpush1.bf16.msra.mxu0 %v382
    %405 = vmatprep.subr.bf16.mxu0 0
    %406 = vmatpush1.bf16.msra.mxu0 %v381
    %407 = vmatprep.subr.bf16.mxu0 0
    %408 = vmatpush1.bf16.msra.mxu0 %v380
    %409 = vmatprep.subr.bf16.mxu0 0
    %410 = vmatpush1.bf16.msra.mxu0 %v379
    %411 = vmatprep.subr.bf16.mxu0 0
    %412 = vmatpush2.bf16.msra.mxu0 0
    %413 = vmatprep.subr.bf16.mxu0 0
    %414 = vmatpush2.bf16.msra.mxu0 0
    %415 = vmatprep.subr.bf16.mxu0 0
    %416 = vmatpush2.bf16.msra.mxu0 0
    %417 = vmatprep.subr.bf16.mxu0 0
    %418 = vmatpush2.bf16.msra.mxu0 0
    %419 = vmatprep.subr.bf16.mxu0 0
    %420 = vmatpush2.bf16.msra.mxu0 0
    %421 = vmatprep.subr.bf16.mxu0 0
    %422 = vmatpush2.bf16.msra.mxu0 0
    %423 = vmatprep.subr.bf16.mxu0 0
    %424 = vmatpush2.bf16.msra.mxu0 0
    %425 = vmatprep.subr.bf16.mxu0 0
    %426 = vmatpush2.bf16.msra.mxu0 0
    %427 = vmatprep.mubr.bf16.mxu0 0
    %428 = vmatmul.mubr.bf16.gmra.mxu0 %v323
    %v429 = vpop.f32.mrf.mxu0
    %v430 = vadd.f32 %v345, %v429
    %v431 = vpop.f32.mrf.mxu0
    %v432 = vpop.f32.mrf.mxu0
    %v433 = vadd.f32 %v345, %v432
    %v434 = vpop.f32.mrf.mxu0
    %435 = vdwg.mxu0
    %v436 = vpack.c.bf16 %v433, %v430
    %v438 = vunpack.c.l.b16 %v436
    %v439 = vunpack.c.h.b16 %v436
    %v440 = vpack.c.b16 %v438, %v438
    %v441 = vpack.c.b16 %v439, %v439
    %444 = vst [vmem:[%s9] sm:$0xf] %v440
    %445 = vst [vmem:[%s9 + $0x4] sm:$0xf] %v441
    // Predicated region
    $region50: #{_forward_impl.1} parent=1 // pred_check
      _
    $region51: #{_forward_impl.1} parent=1 // pred_check_branch
      %447 = sbr.rel (0) target = $region53
    $region52: #{_forward_impl.1} parent=1 // pred_region
      _
    $region53: #{_forward_impl.1} parent=1 // pred_fallthru
      _
    // Predicated region
    $region54: #{_forward_impl.1} parent=1 // pred_check
      _
    $region55: #{_forward_impl.1} parent=1 // pred_check_branch
      %449 = sbr.rel (0) target = $region57
    $region56: #{_forward_impl.1} parent=1 // pred_region
      _
    $region57: #{_forward_impl.1} parent=1 // pred_fallthru
      _
    %450 = vsyncpa [#allocation3], 1
    %451 = vsyncpa [#allocation5], 1

</llo_original>
